<compile_context>
chip_gen: v6e
topology: v6e:2x2x1
jax: 0.10.0
libtpu: 0.0.40
codegen_flags: <defaults>
</compile_context>

<pallas_src>
import jax
import jax.numpy as jnp
from jax.experimental import pallas as pl
from jax.experimental.pallas import tpu as pltpu


# --- sizes / packed-parameter layout ---------------------------------------
IN1, H1, OUT = 4, 3, 2                 # Linear(4,3) -> ReLU -> Linear(3,2)
_W1_OFF = 0                            # w1 row-major (in, out): 12 floats
_B1_OFF = _W1_OFF + IN1 * H1           # b1: 3 floats
_W2_OFF = _B1_OFF + H1                 # w2 row-major (in, out): 6 floats
_B2_OFF = _W2_OFF + H1 * OUT           # b2: 2 floats
_P_LEN = _B2_OFF + OUT                 # 23 floats total


def mlp_kernel(p_ref, xt_ref, ot_ref):
    """Fused Linear(4,3) -> ReLU -> Linear(3,2), batch on the 128-lane axis.

    p_ref : SMEM f32[23]       packed (w1, b1, w2, b2)
    xt_ref: VMEM f32[4, Bblk]  x transposed (features on sublanes, batch on lanes)
    ot_ref: VMEM f32[2, Bblk]  y transposed (lane-dense output)
    """
    xt = xt_ref[...]                                        # (4, Bblk)

    # Hidden layer on the VPU: h_j = relu(b1[j] + sum_k w1[k, j] * x_k)
    h = []
    for j in range(H1):
        acc = p_ref[_W1_OFF + 0 * H1 + j] * xt[0:1, :]
        for k in range(1, IN1):
            acc = acc + p_ref[_W1_OFF + k * H1 + j] * xt[k:k + 1, :]
        acc = acc + p_ref[_B1_OFF + j]
        h.append(jnp.maximum(acc, 0.0))                     # (1, Bblk)

    # Output layer: y_j = b2[j] + sum_k w2[k, j] * h_k
    ys = []
    for j in range(OUT):
        acc = p_ref[_W2_OFF + 0 * OUT + j] * h[0]
        for k in range(1, H1):
            acc = acc + p_ref[_W2_OFF + k * OUT + j] * h[k]
        acc = acc + p_ref[_B2_OFF + j]
        ys.append(acc)                                      # (1, Bblk)

    ot_ref[...] = jnp.concatenate(ys, axis=0).astype(ot_ref.dtype)


def _pack_params(w1, b1, w2, b2):
    return jnp.concatenate([
        jnp.asarray(w1, jnp.float32).reshape(-1),
        jnp.asarray(b1, jnp.float32).reshape(-1),
        jnp.asarray(w2, jnp.float32).reshape(-1),
        jnp.asarray(b2, jnp.float32).reshape(-1),
    ])                                                      # (23,)


def _pick_block_b(B):
    # Batch tile (lane axis) for large B; multiple of 128, conservative vs
    # v7x's smaller VMEM (2048 rows of f32 * (4+2) feats ~= 48 KiB per buffer).
    for blk in (2048, 1024, 512, 256, 128):
        if B % blk == 0 and B // blk >= 2:
            return blk
    return None


def net_forward(x, w1, b1, w2, b2):
    B = x.shape[0]
    params = _pack_params(w1, b1, w2, b2)      # one SMEM slab, one DMA
    xt = jnp.asarray(x, jnp.float32).T         # (4, B): batch on the lane axis

    blk = _pick_block_b(B)
    if blk is None:
        # Small batch: grid-free call -> no per-step pipeline bookkeeping.
        yt = pl.pallas_call(
            mlp_kernel,
            out_shape=jax.ShapeDtypeStruct((OUT, B), jnp.float32),
            in_specs=[
                pl.BlockSpec(memory_space=pltpu.MemorySpace.SMEM),
                pl.BlockSpec(memory_space=pltpu.MemorySpace.VMEM),
            ],
            out_specs=pl.BlockSpec(memory_space=pltpu.MemorySpace.VMEM),
        )(params, xt)
    else:
        # Large batch: tile the lane (batch) axis; tiles are independent.
        yt = pl.pallas_call(
            mlp_kernel,
            out_shape=jax.ShapeDtypeStruct((OUT, B), jnp.float32),
            grid=(B // blk,),
            in_specs=[
                pl.BlockSpec(memory_space=pltpu.MemorySpace.SMEM),
                pl.BlockSpec((IN1, blk), lambda i: (0, i)),
            ],
            out_specs=pl.BlockSpec((OUT, blk), lambda i: (0, i)),
            compiler_params=pltpu.CompilerParams(
                dimension_semantics=("parallel",)),
        )(params, xt)

    return yt.T                                 # (B, 2)


def init_params(key):
    # Mimic torch.nn.Linear default init: uniform(+/- 1/sqrt(fan_in)).
    k1, k2, k3, k4 = jax.random.split(key, 4)
    bound1 = 1.0 / jnp.sqrt(4.0)
    bound2 = 1.0 / jnp.sqrt(3.0)
    w1 = jax.random.uniform(k1, (IN1, H1), jnp.float32, -bound1, bound1)
    b1 = jax.random.uniform(k2, (H1,), jnp.float32, -bound1, bound1)
    w2 = jax.random.uniform(k3, (H1, OUT), jnp.float32, -bound2, bound2)
    b2 = jax.random.uniform(k4, (OUT,), jnp.float32, -bound2, bound2)
    return w1, b1, w2, b2


def _reference(x, w1, b1, w2, b2):
    return jnp.maximum(x @ w1 + b1, 0.0) @ w2 + b2


if __name__ == "__main__":
    key = jax.random.PRNGKey(0)
    kx1, kx2, kp = jax.random.split(key, 3)
    w1, b1, w2, b2 = init_params(kp)

    # Small batch: exercises the grid-free path.
    B_small = 8
    x_small = jax.random.normal(kx1, (B_small, IN1), jnp.float32)
    out_small = jax.block_until_ready(net_forward(x_small, w1, b1, w2, b2))
    ref_small = _reference(x_small, w1, b1, w2, b2)
    assert out_small.shape == (B_small, OUT)
    assert jnp.allclose(out_small, ref_small, atol=1e-5, rtol=1e-5), \
        "small-batch mismatch vs reference"

    # Larger batch: exercises the lane-tiled 'parallel' grid path.
    B_big = 512
    x_big = jax.random.normal(kx2, (B_big, IN1), jnp.float32)
    out_big = jax.block_until_ready(net_forward(x_big, w1, b1, w2, b2))
    ref_big = _reference(x_big, w1, b1, w2, b2)
    assert out_big.shape == (B_big, OUT)
    assert jnp.allclose(out_big, ref_big, atol=1e-5, rtol=1e-5), \
        "large-batch mismatch vs reference"

    print("KERNEL_OK")
</pallas_src>

<mosaic_0001>
module attributes {stable_mosaic.version = 11 : i64} {
  func.func @mlp_kernel(%arg0: memref<23xf32, #tpu.memory_space<smem>>, %arg1: memref<4x8xf32, #tpu.memory_space<vmem>>, %arg2: memref<2x8xf32, #tpu.memory_space<vmem>>) attributes {dimension_semantics = [], scalar_prefetch = 0 : i64, scratch_operands = 0 : i64, tpu.core_type = #tpu.core_type<tc>} {
    %c0 = arith.constant 0 : index
    %c0_0 = arith.constant 0 : index
    %0 = vector.load %arg1[%c0, %c0_0] : memref<4x8xf32, #tpu.memory_space<vmem>>, vector<4x8xf32>
    %c0_1 = arith.constant 0 : index
    %1 = memref.load %arg0[%c0_1] : memref<23xf32, #tpu.memory_space<smem>>
    %2 = vector.extract_strided_slice %0 {offsets = [0, 0], sizes = [1, 8], strides = [1, 1]} : vector<4x8xf32> to vector<1x8xf32>
    %3 = vector.broadcast %1 : f32 to vector<1x8xf32>
    %4 = arith.mulf %3, %2 : vector<1x8xf32>
    %c3 = arith.constant 3 : index
    %5 = memref.load %arg0[%c3] : memref<23xf32, #tpu.memory_space<smem>>
    %6 = vector.extract_strided_slice %0 {offsets = [1, 0], sizes = [1, 8], strides = [1, 1]} : vector<4x8xf32> to vector<1x8xf32>
    %7 = vector.broadcast %5 : f32 to vector<1x8xf32>
    %8 = arith.mulf %7, %6 : vector<1x8xf32>
    %9 = arith.addf %4, %8 : vector<1x8xf32>
    %c6 = arith.constant 6 : index
    %10 = memref.load %arg0[%c6] : memref<23xf32, #tpu.memory_space<smem>>
    %11 = vector.extract_strided_slice %0 {offsets = [2, 0], sizes = [1, 8], strides = [1, 1]} : vector<4x8xf32> to vector<1x8xf32>
    %12 = vector.broadcast %10 : f32 to vector<1x8xf32>
    %13 = arith.mulf %12, %11 : vector<1x8xf32>
    %14 = arith.addf %9, %13 : vector<1x8xf32>
    %c9 = arith.constant 9 : index
    %15 = memref.load %arg0[%c9] : memref<23xf32, #tpu.memory_space<smem>>
    %16 = vector.extract_strided_slice %0 {offsets = [3, 0], sizes = [1, 8], strides = [1, 1]} : vector<4x8xf32> to vector<1x8xf32>
    %17 = vector.broadcast %15 : f32 to vector<1x8xf32>
    %18 = arith.mulf %17, %16 : vector<1x8xf32>
    %19 = arith.addf %14, %18 : vector<1x8xf32>
    %c12 = arith.constant 12 : index
    %20 = memref.load %arg0[%c12] : memref<23xf32, #tpu.memory_space<smem>>
    %21 = vector.broadcast %20 : f32 to vector<1x8xf32>
    %22 = arith.addf %19, %21 : vector<1x8xf32>
    %cst = arith.constant 0.000000e+00 : f32
    %23 = vector.broadcast %cst : f32 to vector<1x8xf32>
    %24 = arith.maximumf %22, %23 : vector<1x8xf32>
    %c1 = arith.constant 1 : index
    %25 = memref.load %arg0[%c1] : memref<23xf32, #tpu.memory_space<smem>>
    %26 = vector.extract_strided_slice %0 {offsets = [0, 0], sizes = [1, 8], strides = [1, 1]} : vector<4x8xf32> to vector<1x8xf32>
    %27 = vector.broadcast %25 : f32 to vector<1x8xf32>
    %28 = arith.mulf %27, %26 : vector<1x8xf32>
    %c4 = arith.constant 4 : index
    %29 = memref.load %arg0[%c4] : memref<23xf32, #tpu.memory_space<smem>>
    %30 = vector.extract_strided_slice %0 {offsets = [1, 0], sizes = [1, 8], strides = [1, 1]} : vector<4x8xf32> to vector<1x8xf32>
    %31 = vector.broadcast %29 : f32 to vector<1x8xf32>
    %32 = arith.mulf %31, %30 : vector<1x8xf32>
    %33 = arith.addf %28, %32 : vector<1x8xf32>
    %c7 = arith.constant 7 : index
    %34 = memref.load %arg0[%c7] : memref<23xf32, #tpu.memory_space<smem>>
    %35 = vector.extract_strided_slice %0 {offsets = [2, 0], sizes = [1, 8], strides = [1, 1]} : vector<4x8xf32> to vector<1x8xf32>
    %36 = vector.broadcast %34 : f32 to vector<1x8xf32>
    %37 = arith.mulf %36, %35 : vector<1x8xf32>
    %38 = arith.addf %33, %37 : vector<1x8xf32>
    %c10 = arith.constant 10 : index
    %39 = memref.load %arg0[%c10] : memref<23xf32, #tpu.memory_space<smem>>
    %40 = vector.extract_strided_slice %0 {offsets = [3, 0], sizes = [1, 8], strides = [1, 1]} : vector<4x8xf32> to vector<1x8xf32>
    %41 = vector.broadcast %39 : f32 to vector<1x8xf32>
    %42 = arith.mulf %41, %40 : vector<1x8xf32>
    %43 = arith.addf %38, %42 : vector<1x8xf32>
    %c13 = arith.constant 13 : index
    %44 = memref.load %arg0[%c13] : memref<23xf32, #tpu.memory_space<smem>>
    %45 = vector.broadcast %44 : f32 to vector<1x8xf32>
    %46 = arith.addf %43, %45 : vector<1x8xf32>
    %cst_2 = arith.constant 0.000000e+00 : f32
    %47 = vector.broadcast %cst_2 : f32 to vector<1x8xf32>
    %48 = arith.maximumf %46, %47 : vector<1x8xf32>
    %c2 = arith.constant 2 : index
    %49 = memref.load %arg0[%c2] : memref<23xf32, #tpu.memory_space<smem>>
    %50 = vector.extract_strided_slice %0 {offsets = [0, 0], sizes = [1, 8], strides = [1, 1]} : vector<4x8xf32> to vector<1x8xf32>
    %51 = vector.broadcast %49 : f32 to vector<1x8xf32>
    %52 = arith.mulf %51, %50 : vector<1x8xf32>
    %c5 = arith.constant 5 : index
    %53 = memref.load %arg0[%c5] : memref<23xf32, #tpu.memory_space<smem>>
    %54 = vector.extract_strided_slice %0 {offsets = [1, 0], sizes = [1, 8], strides = [1, 1]} : vector<4x8xf32> to vector<1x8xf32>
    %55 = vector.broadcast %53 : f32 to vector<1x8xf32>
    %56 = arith.mulf %55, %54 : vector<1x8xf32>
    %57 = arith.addf %52, %56 : vector<1x8xf32>
    %c8 = arith.constant 8 : index
    %58 = memref.load %arg0[%c8] : memref<23xf32, #tpu.memory_space<smem>>
    %59 = vector.extract_strided_slice %0 {offsets = [2, 0], sizes = [1, 8], strides = [1, 1]} : vector<4x8xf32> to vector<1x8xf32>
    %60 = vector.broadcast %58 : f32 to vector<1x8xf32>
    %61 = arith.mulf %60, %59 : vector<1x8xf32>
    %62 = arith.addf %57, %61 : vector<1x8xf32>
    %c11 = arith.constant 11 : index
    %63 = memref.load %arg0[%c11] : memref<23xf32, #tpu.memory_space<smem>>
    %64 = vector.extract_strided_slice %0 {offsets = [3, 0], sizes = [1, 8], strides = [1, 1]} : vector<4x8xf32> to vector<1x8xf32>
    %65 = vector.broadcast %63 : f32 to vector<1x8xf32>
    %66 = arith.mulf %65, %64 : vector<1x8xf32>
    %67 = arith.addf %62, %66 : vector<1x8xf32>
    %c14 = arith.constant 14 : index
    %68 = memref.load %arg0[%c14] : memref<23xf32, #tpu.memory_space<smem>>
    %69 = vector.broadcast %68 : f32 to vector<1x8xf32>
    %70 = arith.addf %67, %69 : vector<1x8xf32>
    %cst_3 = arith.constant 0.000000e+00 : f32
    %71 = vector.broadcast %cst_3 : f32 to vector<1x8xf32>
    %72 = arith.maximumf %70, %71 : vector<1x8xf32>
    %c15 = arith.constant 15 : index
    %73 = memref.load %arg0[%c15] : memref<23xf32, #tpu.memory_space<smem>>
    %74 = vector.broadcast %73 : f32 to vector<1x8xf32>
    %75 = arith.mulf %74, %24 : vector<1x8xf32>
    %c17 = arith.constant 17 : index
    %76 = memref.load %arg0[%c17] : memref<23xf32, #tpu.memory_space<smem>>
    %77 = vector.broadcast %76 : f32 to vector<1x8xf32>
    %78 = arith.mulf %77, %48 : vector<1x8xf32>
    %79 = arith.addf %75, %78 : vector<1x8xf32>
    %c19 = arith.constant 19 : index
    %80 = memref.load %arg0[%c19] : memref<23xf32, #tpu.memory_space<smem>>
    %81 = vector.broadcast %80 : f32 to vector<1x8xf32>
    %82 = arith.mulf %81, %72 : vector<1x8xf32>
    %83 = arith.addf %79, %82 : vector<1x8xf32>
    %c21 = arith.constant 21 : index
    %84 = memref.load %arg0[%c21] : memref<23xf32, #tpu.memory_space<smem>>
    %85 = vector.broadcast %84 : f32 to vector<1x8xf32>
    %86 = arith.addf %83, %85 : vector<1x8xf32>
    %c16 = arith.constant 16 : index
    %87 = memref.load %arg0[%c16] : memref<23xf32, #tpu.memory_space<smem>>
    %88 = vector.broadcast %87 : f32 to vector<1x8xf32>
    %89 = arith.mulf %88, %24 : vector<1x8xf32>
    %c18 = arith.constant 18 : index
    %90 = memref.load %arg0[%c18] : memref<23xf32, #tpu.memory_space<smem>>
    %91 = vector.broadcast %90 : f32 to vector<1x8xf32>
    %92 = arith.mulf %91, %48 : vector<1x8xf32>
    %93 = arith.addf %89, %92 : vector<1x8xf32>
    %c20 = arith.constant 20 : index
    %94 = memref.load %arg0[%c20] : memref<23xf32, #tpu.memory_space<smem>>
    %95 = vector.broadcast %94 : f32 to vector<1x8xf32>
    %96 = arith.mulf %95, %72 : vector<1x8xf32>
    %97 = arith.addf %93, %96 : vector<1x8xf32>
    %c22 = arith.constant 22 : index
    %98 = memref.load %arg0[%c22] : memref<23xf32, #tpu.memory_space<smem>>
    %99 = vector.broadcast %98 : f32 to vector<1x8xf32>
    %100 = arith.addf %97, %99 : vector<1x8xf32>
    %101 = tpu.concatenate %86, %100 in 0 : vector<1x8xf32>, vector<1x8xf32> -> vector<2x8xf32>
    %c0_4 = arith.constant 0 : index
    %c0_5 = arith.constant 0 : index
    %102 = vector.load %arg2[%c0_4, %c0_5] : memref<2x8xf32, #tpu.memory_space<vmem>>, vector<2x8xf32>
    tpu.vector_store %arg2[%c0_4, %c0_5], %101 {strides = array<i32>} : memref<2x8xf32, #tpu.memory_space<vmem>>, vector<2x8xf32>,
    return
  }
}

</mosaic_0001>

<llo_original>
// kernel: tpu_custom_call.1
$region0: #{tpu_custom_call.1}
  #allocation0 [shape = 'u32[]', space=smem, size = 0x4, offset = 0x4, fixed_abs, tag = 'smem constant byte address 0x4 - core index']
  #allocation1 [shape = 'u32[144,128]{1,0:T(1,128)}', space=vmem, size = 0x12000, scoped, tag = 'internal scratch']
  %s0 = inlined_call_operand.hbm [shape: f32[23], index: 0, kind: input, shape index: {}]
  %s1 = inlined_call_operand.hbm [shape: f32[4,8], index: 1, kind: input, shape index: {}]
  %s2 = inlined_call_operand.hbm [shape: f32[2,8], index: 2, kind: output, shape index: {}]
  %s3 = sld [smem:[#allocation0]]
  $region26: #{tpu_custom_call.1} parent=0
    _
  %s5 = ssub.s32 1, %s3
  %s6 = scalar_select 0, %s5, %s3
  $region1: #{tpu_custom_call.1} parent=0
    #allocation2 [shape = 'u8[512]{0}', space=smem, size = 0x200, scoped, tag = 'input window, operand 0, single buffered']
    #allocation3 [shape = 's32[1]{0}', space=sflag, size = 0x4, scoped, tag = 'scoped memory for tpu_custom_call.1']
    #allocation4 [shape = 's32[1]{0}', space=sflag, size = 0x4, scoped, tag = 'scoped memory for tpu_custom_call.1']
    #allocation5 [shape = 's32[1]{0}', space=sflag, size = 0x4, scoped, tag = 'scoped memory for tpu_custom_call.1']
    #allocation6 [shape = 'u8[2048]{0}', space=vmem, size = 0x800, scoped, tag = 'input window, operand 1, single buffered']
    #allocation7 [shape = 'u8[1024]{0}', space=vmem, size = 0x400, scoped, tag = 'output window, operand 0, single buffered']
    %7 = vsyncpa [#allocation5], 0
    %8 = vsyncpa [#allocation3], 0
    %9 = vsyncpa [#allocation4], 0
    // Predicated region
    $region2: #{tpu_custom_call.1} parent=1 // pred_check
      _
    $region3: #{tpu_custom_call.1} parent=1 // pred_check_branch
      %11 = sbr.rel (0) target = $region5
    $region4: #{tpu_custom_call.1} parent=1 // pred_region
      %s13 = ssub.s32 16, 16
      %14 = vsyncadd [#allocation5], %s13
      %17 = dma.hbm_to_smem %s0, 16, [#allocation2], [#allocation5]
    $region5: #{tpu_custom_call.1} parent=1 // pred_fallthru
      _
    // Predicated region
    $region6: #{tpu_custom_call.1} parent=1 // pred_check
      _
    $region7: #{tpu_custom_call.1} parent=1 // pred_check_branch
      %19 = sbr.rel (0) target = $region9
    $region8: #{tpu_custom_call.1} parent=1 // pred_region
      %s21 = ssub.s32 64, 64
      %22 = vsyncadd [#allocation3], %s21
      %s24 = sshll.u32 [#allocation6], 4
      %s25 = int_to_ptr.vmem [resolvable:$true] %s24
      %27 = dma.hbm_to_vmem [thread:$0]  %s1, 64, %s25, [#allocation3]
    $region9: #{tpu_custom_call.1} parent=1 // pred_fallthru
      _
    // Predicated region
    $region10: #{tpu_custom_call.1} parent=1 // pred_check
      _
    $region11: #{tpu_custom_call.1} parent=1 // pred_check_branch
      %29 = sbr.rel (0) target = $region13
    $region12: #{tpu_custom_call.1} parent=1 // pred_region
      %30 = dma.done [#allocation5], 16
    $region13: #{tpu_custom_call.1} parent=1 // pred_fallthru
      _
    // Predicated region
    $region14: #{tpu_custom_call.1} parent=1 // pred_check
      _
    $region15: #{tpu_custom_call.1} parent=1 // pred_check_branch
      %32 = sbr.rel (0) target = $region17
    $region16: #{tpu_custom_call.1} parent=1 // pred_region
      %33 = dma.done [#allocation3], 64
    $region17: #{tpu_custom_call.1} parent=1 // pred_fallthru
      _
    %34 = sfence
    %v35 = vld [vmem:[#allocation6] sm:$0xf]
    %s36 = sld [smem:[#allocation2]]
    %v37 = vstv %s36
    %v38 = vmul.f32 %v37, %v35
    %s39 = sld [smem:[#allocation2 + $0x3]]
    %v40 = vstv %s39
    %v41 = vmul.f32 %v40, %v35
    %v43 = vrot.slane %v41, 1
    %v45 = vadd.f32 %v38, %v43
    %s46 = sld [smem:[#allocation2 + $0x6]]
    %v47 = vstv %s46
    %v48 = vmul.f32 %v47, %v35
    %v50 = vrot.slane %v48, 2
    %v52 = vadd.f32 %v45, %v50
    %s53 = sld [smem:[#allocation2 + $0x9]]
    %v54 = vstv %s53
    %v55 = vmul.f32 %v54, %v35
    %v57 = vrot.slane %v55, 3
    %v59 = vadd.f32 %v52, %v57
    %s60 = sld [smem:[#allocation2 + $0xc]]
    %v61 = vstv %s60
    %v62 = vadd.f32 %v59, %v61
    %v63 = vmax.f32 %v62, 0.0
    %s64 = sld [smem:[#allocation2 + $0x1]]
    %v65 = vstv %s64
    %v66 = vmul.f32 %v65, %v35
    %s67 = sld [smem:[#allocation2 + $0x4]]
    %v68 = vstv %s67
    %v69 = vmul.f32 %v68, %v35
    %v71 = vrot.slane %v69, 1
    %v73 = vadd.f32 %v66, %v71
    %s74 = sld [smem:[#allocation2 + $0x7]]
    %v75 = vstv %s74
    %v76 = vmul.f32 %v75, %v35
    %v78 = vrot.slane %v76, 2
    %v80 = vadd.f32 %v73, %v78
    %s81 = sld [smem:[#allocation2 + $0xa]]
    %v82 = vstv %s81
    %v83 = vmul.f32 %v82, %v35
    %v85 = vrot.slane %v83, 3
    %v87 = vadd.f32 %v80, %v85
    %s88 = sld [smem:[#allocation2 + $0xd]]
    %v89 = vstv %s88
    %v90 = vadd.f32 %v87, %v89
    %v91 = vmax.f32 %v90, 0.0
    %s92 = sld [smem:[#allocation2 + $0x2]]
    %v93 = vstv %s92
    %v94 = vmul.f32 %v93, %v35
    %s95 = sld [smem:[#allocation2 + $0x5]]
    %v96 = vstv %s95
    %v97 = vmul.f32 %v96, %v35
    %v99 = vrot.slane %v97, 1
    %v101 = vadd.f32 %v94, %v99
    %s102 = sld [smem:[#allocation2 + $0x8]]
    %v103 = vstv %s102
    %v104 = vmul.f32 %v103, %v35
    %v106 = vrot.slane %v104, 2
    %v108 = vadd.f32 %v101, %v106
    %s109 = sld [smem:[#allocation2 + $0xb]]
    %v110 = vstv %s109
    %v111 = vmul.f32 %v110, %v35
    %v113 = vrot.slane %v111, 3
    %v115 = vadd.f32 %v108, %v113
    %s116 = sld [smem:[#allocation2 + $0xe]]
    %v117 = vstv %s116
    %v118 = vadd.f32 %v115, %v117
    %v119 = vmax.f32 %v118, 0.0
    %s120 = sld [smem:[#allocation2 + $0xf]]
    %v121 = vstv %s120
    %v122 = vmul.f32 %v121, %v63
    %s123 = sld [smem:[#allocation2 + $0x11]]
    %v124 = vstv %s123
    %v125 = vmul.f32 %v124, %v91
    %v126 = vadd.f32 %v122, %v125
    %s127 = sld [smem:[#allocation2 + $0x13]]
    %v128 = vstv %s127
    %v129 = vmul.f32 %v128, %v119
    %v130 = vadd.f32 %v126, %v129
    %s131 = sld [smem:[#allocation2 + $0x15]]
    %v132 = vstv %s131
    %v133 = vadd.f32 %v130, %v132
    %s134 = sld [smem:[#allocation2 + $0x10]]
    %v135 = vstv %s134
    %v136 = vmul.f32 %v135, %v63
    %s137 = sld [smem:[#allocation2 + $0x12]]
    %v138 = vstv %s137
    %v139 = vmul.f32 %v138, %v91
    %v140 = vadd.f32 %v136, %v139
    %s141 = sld [smem:[#allocation2 + $0x14]]
    %v142 = vstv %s141
    %v143 = vmul.f32 %v142, %v119
    %v144 = vadd.f32 %v140, %v143
    %s145 = sld [smem:[#allocation2 + $0x16]]
    %v146 = vstv %s145
    %v147 = vadd.f32 %v144, %v146
    %v149 = vrot.slane %v147, 7
    %vm151 = vcmask 1040384
    %v152 = vsel %vm151, %v133, %v149
    %vm153 = vcmask 58368
    %154 = vst.msk [vmem:[#allocation7] sm:$0x3] %vm153, %v152
    // Predicated region
    $region18: #{tpu_custom_call.1} parent=1 // pred_check
      _
    $region19: #{tpu_custom_call.1} parent=1 // pred_check_branch
      %156 = sbr.rel (0) target = $region21
    $region20: #{tpu_custom_call.1} parent=1 // pred_region
      %s158 = ssub.s32 32, 32
      %159 = vsyncadd [#allocation4], %s158
      %s161 = sshll.u32 [#allocation7], 4
      %s162 = int_to_ptr.vmem [resolvable:$true] %s161
      %164 = dma.vmem_to_hbm [thread:$0]  %s162, 32, %s2, [#allocation4]
    $region21: #{tpu_custom_call.1} parent=1 // pred_fallthru
      _
    // Predicated region
    $region22: #{tpu_custom_call.1} parent=1 // pred_check
      _
    $region23: #{tpu_custom_call.1} parent=1 // pred_check_branch
      %166 = sbr.rel (0) target = $region25
    $region24: #{tpu_custom_call.1} parent=1 // pred_region
      %167 = dma.done [#allocation4], 32
    $region25: #{tpu_custom_call.1} parent=1 // pred_fallthru
      _
    %168 = vsyncpa [#allocation3], 1
    %169 = vsyncpa [#allocation4], 1
    %170 = vsyncpa [#allocation5], 1

</llo_original>
